<compile_context>
chip_gen: v7x
topology: tpu7x:2x2x1
jax: 0.10.0
libtpu: 0.0.40
codegen_flags: <defaults>
</compile_context>

<pallas_src>
import functools

import jax
import jax.numpy as jnp
from jax.experimental import pallas as pl
from jax.experimental.pallas import tpu as pltpu

BN_EPS = 1e-5
NEG_SLOPE = 0.2
TILE_MAX = 8192        # pixels per tile (sweepable 4096-8192)
CONV2_MXU_BF16 = True  # bf16 MXU operands for conv2 (weights pre-cast once)


def _round_up(x, m):
    return (x + m - 1) // m * m


def _leaky_relu(x):
    # max(x, a*x): 2 VALU ops vs 3 for where(x >= 0, x, a*x).
    return jnp.maximum(x, NEG_SLOPE * x)


def _encode_h1(x, w1_ref, b1_ref, cin):
    """conv1 (Cin->C1, depth K=Cin tiny -> VPU broadcast FMAs) + bias + LeakyReLU."""
    acc = w1_ref[:, 0:1] * x[0:1, :]
    for c in range(1, cin):
        acc = acc + w1_ref[:, c:c + 1] * x[c:c + 1, :]
    return _leaky_relu(acc + b1_ref[...])                      # (C1, TILE) f32


def _stats_kernel(x_ref, w1_ref, b1_ref, sum_ref, gram_ref, *,
                  cin, hw, tile, needs_mask):
    """Pass 1: per-tile s = sum_p h1 and Gram G = h1 @ h1^T (f32 MXU).

    Linearity of conv2 lets the JAX epilogue recover
        mean    = W2 . s / count
        E[h2^2] = diag(W2 . G . W2^T) / count
    without materializing h2, squaring it, or running lane-wide reductions.
    """
    h1 = _encode_h1(x_ref[0], w1_ref, b1_ref, cin)
    if needs_mask:  # keep padded pixels out of the global BN statistics
        t = pl.program_id(1)
        lane = jax.lax.broadcasted_iota(jnp.int32, (1, tile), 1)
        valid = (t * tile + lane) < hw
        h1 = jnp.where(valid, h1, 0.0)
    sum_ref[...] = jnp.sum(h1, axis=1, keepdims=True).reshape(sum_ref.shape)
    gram = jax.lax.dot_general(h1, h1, (((1,), (1,)), ((), ())),
                               preferred_element_type=jnp.float32)
    gram_ref[...] = gram.reshape(gram_ref.shape)


def _apply_kernel(x_ref, w1_ref, b1_ref, w2_ref, scale_ref, shift_ref, w3_ref,
                  o_ref, *, cin):
    """Pass 2: recompute trunk, apply folded BN + LeakyReLU + 1-channel conv."""
    h1 = _encode_h1(x_ref[0], w1_ref, b1_ref, cin)
    # conv2: (C2,C1)@(C1,TILE) on the MXU; w2 arrives pre-cast (bf16 fast path).
    h2 = jnp.dot(w2_ref[...], h1.astype(w2_ref.dtype),
                 preferred_element_type=jnp.float32)
    h2n = _leaky_relu(h2 * scale_ref[...] + shift_ref[...])    # folded BatchNorm
    # conv3 (C2 -> 1): VPU multiply + sublane reduce -> lane-dense (1, TILE).
    out = jnp.sum(h2n * w3_ref[...], axis=0, keepdims=True)
    o_ref[...] = out.reshape(o_ref.shape)


def _choose_tile(hw, n, tile_max):
    tile = min(tile_max, _round_up(hw, 128))
    # With N == 1 keep >= 2 pixel tiles so the "parallel" grid can shard across
    # both v7x TensorCores.
    if n == 1:
        while tile > 128 and (hw + tile - 1) // tile < 2:
            tile = _round_up(tile // 2, 128)
    return tile


def ae_generator_forward(x_nchw, params, tile_max=TILE_MAX):
    """x_nchw: (N, Cin, H, W) float32 -> (N, 1, H, W) float32."""
    w1, b1, w2, gamma, beta, w3 = params
    N, cin, H, W = x_nchw.shape
    c1 = w1.shape[0]
    c2 = w2.shape[0]
    hw = H * W

    tile = _choose_tile(hw, N, tile_max)
    hwp = _round_up(hw, tile)
    ntiles = hwp // tile
    needs_mask = hwp != hw

    x3 = x_nchw.reshape(N, cin, hw)
    if needs_mask:
        x3 = jnp.pad(x3, ((0, 0), (0, 0), (0, hwp - hw)))

    # Pre-cast conv2 weights once (reused N*ntiles times) instead of per tile.
    w2_k = w2.astype(jnp.bfloat16) if CONV2_MXU_BF16 else w2

    x_spec = pl.BlockSpec((1, cin, tile), lambda n, t: (n, 0, t))
    w1_spec = pl.BlockSpec((c1, cin), lambda n, t: (0, 0))
    b1_spec = pl.BlockSpec((c1, 1), lambda n, t: (0, 0))
    w2_spec = pl.BlockSpec((c2, c1), lambda n, t: (0, 0))
    col_spec = pl.BlockSpec((c2, 1), lambda n, t: (0, 0))
    sum_spec = pl.BlockSpec((1, 1, c1, 1), lambda n, t: (n, t, 0, 0))
    gram_spec = pl.BlockSpec((1, 1, c1, c1), lambda n, t: (n, t, 0, 0))
    out_spec = pl.BlockSpec((1, 1, 1, tile), lambda n, t: (n, t, 0, 0))

    # VMEM budget: x double-buffer + h1 + h2/h2n (+ headroom); fits v7x 64 MiB/TC.
    vmem_est = 4 * tile * (2 * cin + c1 + 2 * c2) + (4 << 20)
    cparams = pltpu.CompilerParams(
        dimension_semantics=("parallel", "parallel"),
        vmem_limit_bytes=int(min(max(vmem_est, 16 << 20), 48 << 20)))

    # ---- Pass 1: per-tile h1 sum + Gram (f32). ----
    psum, pgram = pl.pallas_call(
        functools.partial(_stats_kernel, cin=cin, hw=hw, tile=tile,
                          needs_mask=needs_mask),
        grid=(N, ntiles),
        in_specs=[x_spec, w1_spec, b1_spec],
        out_specs=(sum_spec, gram_spec),
        out_shape=(jax.ShapeDtypeStruct((N, ntiles, c1, 1), jnp.float32),
                   jax.ShapeDtypeStruct((N, ntiles, c1, c1), jnp.float32)),
        compiler_params=cparams,
        cost_estimate=pl.CostEstimate(
            flops=2 * N * hwp * c1 * (cin + c1) + N * hwp * c1,
            transcendentals=0,
            bytes_accessed=4 * (N * hwp * cin + c1 * cin + c1
                                + N * ntiles * c1 * (c1 + 1))),
    )(x3, w1, b1)

    # Tiny JAX epilogue: global train-mode BN stats from the Gram, folded into
    # per-channel scale/shift.  NOTE: var = E[x^2] - E[x]^2 in f32 can cancel
    # when |mean| >> std; acceptable for roughly zero-mean activations here.
    count = jnp.float32(N * hw)
    s_tot = jnp.sum(psum, axis=(0, 1))                         # (C1, 1)
    g_tot = jnp.sum(pgram, axis=(0, 1))                        # (C1, C1)
    mean = (w2 @ s_tot) / count                                # (C2, 1)
    e2 = jnp.sum((w2 @ g_tot) * w2, axis=1, keepdims=True) / count
    var = jnp.maximum(e2 - mean * mean, 0.0)
    inv_std = jax.lax.rsqrt(var + BN_EPS)
    scale = gamma * inv_std
    shift = beta - mean * scale

    # ---- Pass 2: recompute trunk, apply folded BN + LeakyReLU + final conv. ----
    y = pl.pallas_call(
        functools.partial(_apply_kernel, cin=cin),
        grid=(N, ntiles),
        in_specs=[x_spec, w1_spec, b1_spec, w2_spec, col_spec, col_spec, col_spec],
        out_specs=out_spec,
        out_shape=jax.ShapeDtypeStruct((N, ntiles, 1, tile), jnp.float32),
        compiler_params=cparams,
        cost_estimate=pl.CostEstimate(
            flops=2 * N * hwp * (cin * c1 + c1 * c2 + 4 * c2),
            transcendentals=0,
            bytes_accessed=4 * (N * hwp * (cin + 1) + c1 * cin + c1
                                + c2 * c1 + 3 * c2)),
    )(x3, w1, b1, w2_k, scale, shift, w3)

    return y.reshape(N, hwp)[:, :hw].reshape(N, 1, H, W)


def init_params(key, input_nc, ndf):
    k1, k2, k3, kb = jax.random.split(key, 4)
    c1, c2 = ndf, 2 * ndf
    # Conv 1x1 weights kept in native PyTorch (Cout, Cin) orientation.
    w1 = 0.1 * jax.random.normal(k1, (c1, input_nc), jnp.float32)
    b1 = 0.1 * jax.random.normal(kb, (c1, 1), jnp.float32)
    w2 = 0.1 * jax.random.normal(k2, (c2, c1), jnp.float32)
    gamma = jnp.ones((c2, 1), jnp.float32)   # BatchNorm2d default affine init
    beta = jnp.zeros((c2, 1), jnp.float32)
    w3 = 0.1 * jax.random.normal(k3, (c2, 1), jnp.float32)  # (1, C2) transposed
    return (w1, b1, w2, gamma, beta, w3)


def _reference(x_nchw, params, conv2_bf16=False):
    """Pure-JAX reference (train-mode BN).  BN statistics always from f32 h2
    (matching the kernel's f32 Gram stats); `conv2_bf16` mirrors the kernel's
    optional bf16 MXU operands on the output path."""
    w1, b1, w2, gamma, beta, w3 = params
    N, cin, H, W = x_nchw.shape
    x = x_nchw.reshape(N, cin, H * W)
    h1 = _leaky_relu(jnp.einsum('oc,ncp->nop', w1, x) + b1[None])
    h2_stats = jnp.einsum('oc,ncp->nop', w2, h1)
    mean = jnp.mean(h2_stats, axis=(0, 2), keepdims=True)
    var = jnp.mean(h2_stats * h2_stats, axis=(0, 2), keepdims=True) - mean * mean
    if conv2_bf16:
        h2 = jnp.einsum('oc,ncp->nop', w2.astype(jnp.bfloat16),
                        h1.astype(jnp.bfloat16),
                        preferred_element_type=jnp.float32)
    else:
        h2 = h2_stats
    h2n = _leaky_relu((h2 - mean) / jnp.sqrt(var + BN_EPS) * gamma[None]
                      + beta[None])
    y = jnp.einsum('ck,ncp->nkp', w3, h2n)
    return y.reshape(N, 1, H, W)


if __name__ == "__main__":
    key = jax.random.PRNGKey(0)
    kx, kp = jax.random.split(key)

    N, input_nc, H, W = 2, 4, 16, 16
    ndf = 64

    x = jax.random.normal(kx, (N, input_nc, H, W), jnp.float32)
    params = init_params(kp, input_nc, ndf)

    y = jax.block_until_ready(ae_generator_forward(x, params))
    assert y.shape == (N, 1, H, W)

    # Tight check vs a reference with matching numerics (f32 BN stats,
    # bf16 conv2 output path when CONV2_MXU_BF16).
    y_match = _reference(x, params, conv2_bf16=CONV2_MXU_BF16)
    assert jnp.allclose(y, y_match, atol=5e-3, rtol=5e-3)

    # Looser check vs the pure-f32 PyTorch-semantics reference (only the bf16
    # cast of the conv2 MXU operands on the output path differs).
    y_f32 = _reference(x, params, conv2_bf16=False)
    assert jnp.allclose(y, y_f32, atol=5e-2, rtol=5e-2)

    print("KERNEL_OK")
</pallas_src>

<mosaic_0001>
module attributes {stable_mosaic.version = 11 : i64} {
  func.func @_stats_kernel(%arg0: i32, %arg1: i32, %arg2: memref<1x4x256xf32, #tpu.memory_space<vmem>>, %arg3: memref<64x4xf32, #tpu.memory_space<vmem>>, %arg4: memref<64x1xf32, #tpu.memory_space<vmem>>, %arg5: memref<1x1x64x1xf32, #tpu.memory_space<vmem>>, %arg6: memref<1x1x64x64xf32, #tpu.memory_space<vmem>>) attributes {dimension_semantics = [#tpu.dimension_semantics<parallel>, #tpu.dimension_semantics<parallel>], iteration_bounds = array<i64: 2, 1>, scalar_prefetch = 0 : i64, scratch_operands = 0 : i64, tpu.core_type = #tpu.core_type<tc>, window_params = [{transform_indices = @transform_0, window_bounds = array<i64: 1, 4, 256>}, {pipeline_mode = #tpu.pipeline_mode<synchronous>, transform_indices = @transform_1, window_bounds = array<i64: 64, 4>}, {pipeline_mode = #tpu.pipeline_mode<synchronous>, transform_indices = @transform_2, window_bounds = array<i64: 64, 1>}, {transform_indices = @transform_3, window_bounds = array<i64: 1, 1, 64, 1>}, {transform_indices = @transform_4, window_bounds = array<i64: 1, 1, 64, 64>}]} {
    %c0 = arith.constant 0 : index
    %c0_0 = arith.constant 0 : index
    %c0_1 = arith.constant 0 : index
    %0 = vector.load %arg2[%c0, %c0_0, %c0_1] : memref<1x4x256xf32, #tpu.memory_space<vmem>>, vector<1x4x256xf32>
    %1 = vector.shape_cast %0 : vector<1x4x256xf32> to vector<4x256xf32>
    %c0_2 = arith.constant 0 : index
    %c0_3 = arith.constant 0 : index
    %2 = vector.load %arg3[%c0_2, %c0_3] : memref<64x4xf32, #tpu.memory_space<vmem>>, vector<64x1xf32>
    %3 = vector.extract_strided_slice %1 {offsets = [0, 0], sizes = [1, 256], strides = [1, 1]} : vector<4x256xf32> to vector<1x256xf32>
    %4 = vector.broadcast %2 : vector<64x1xf32> to vector<64x256xf32>
    %5 = vector.broadcast %3 : vector<1x256xf32> to vector<64x256xf32>
    %6 = arith.mulf %4, %5 : vector<64x256xf32>
    %c0_4 = arith.constant 0 : index
    %c1 = arith.constant 1 : index
    %7 = vector.load %arg3[%c0_4, %c1] : memref<64x4xf32, #tpu.memory_space<vmem>>, vector<64x1xf32>
    %8 = vector.extract_strided_slice %1 {offsets = [1, 0], sizes = [1, 256], strides = [1, 1]} : vector<4x256xf32> to vector<1x256xf32>
    %9 = vector.broadcast %7 : vector<64x1xf32> to vector<64x256xf32>
    %10 = vector.broadcast %8 : vector<1x256xf32> to vector<64x256xf32>
    %11 = arith.mulf %9, %10 : vector<64x256xf32>
    %12 = arith.addf %6, %11 : vector<64x256xf32>
    %c0_5 = arith.constant 0 : index
    %c2 = arith.constant 2 : index
    %13 = vector.load %arg3[%c0_5, %c2] : memref<64x4xf32, #tpu.memory_space<vmem>>, vector<64x1xf32>
    %14 = vector.extract_strided_slice %1 {offsets = [2, 0], sizes = [1, 256], strides = [1, 1]} : vector<4x256xf32> to vector<1x256xf32>
    %15 = vector.broadcast %13 : vector<64x1xf32> to vector<64x256xf32>
    %16 = vector.broadcast %14 : vector<1x256xf32> to vector<64x256xf32>
    %17 = arith.mulf %15, %16 : vector<64x256xf32>
    %18 = arith.addf %12, %17 : vector<64x256xf32>
    %c0_6 = arith.constant 0 : index
    %c3 = arith.constant 3 : index
    %19 = vector.load %arg3[%c0_6, %c3] : memref<64x4xf32, #tpu.memory_space<vmem>>, vector<64x1xf32>
    %20 = vector.extract_strided_slice %1 {offsets = [3, 0], sizes = [1, 256], strides = [1, 1]} : vector<4x256xf32> to vector<1x256xf32>
    %21 = vector.broadcast %19 : vector<64x1xf32> to vector<64x256xf32>
    %22 = vector.broadcast %20 : vector<1x256xf32> to vector<64x256xf32>
    %23 = arith.mulf %21, %22 : vector<64x256xf32>
    %24 = arith.addf %18, %23 : vector<64x256xf32>
    %c0_7 = arith.constant 0 : index
    %c0_8 = arith.constant 0 : index
    %25 = vector.load %arg4[%c0_7, %c0_8] : memref<64x1xf32, #tpu.memory_space<vmem>>, vector<64x1xf32>
    %26 = vector.broadcast %25 : vector<64x1xf32> to vector<64x256xf32>
    %27 = arith.addf %24, %26 : vector<64x256xf32>
    %cst = arith.constant 2.000000e-01 : f32
    %28 = vector.broadcast %cst : f32 to vector<64x256xf32>
    %29 = arith.mulf %28, %27 : vector<64x256xf32>
    %30 = arith.maximumf %27, %29 : vector<64x256xf32>
    %cst_9 = arith.constant dense<0.000000e+00> : vector<64xf32>
    %31 = vector.multi_reduction <add>, %30, %cst_9 [1] : vector<64x256xf32> to vector<64xf32>
    %32 = vector.shape_cast %31 : vector<64xf32> to vector<64x1xf32>
    %33 = vector.shape_cast %32 : vector<64x1xf32> to vector<1x1x64x1xf32>
    %c0_10 = arith.constant 0 : index
    %c0_11 = arith.constant 0 : index
    %c0_12 = arith.constant 0 : index
    %c0_13 = arith.constant 0 : index
    %34 = vector.load %arg5[%c0_10, %c0_11, %c0_12, %c0_13] : memref<1x1x64x1xf32, #tpu.memory_space<vmem>>, vector<1x1x64x1xf32>
    tpu.vector_store %arg5[%c0_10, %c0_11, %c0_12, %c0_13], %33 {strides = array<i32>} : memref<1x1x64x1xf32, #tpu.memory_space<vmem>>, vector<1x1x64x1xf32>,
    %cst_14 = arith.constant dense<0.000000e+00> : vector<64x64xf32>
    %35 = tpu.matmul %30, %30, %cst_14 {dimension_numbers = #tpu.dot_dimension_numbers<[1], [1], [0], [0], [0, 0, 1, 0], [], []>} : vector<64x256xf32>, vector<64x256xf32>, vector<64x64xf32> -> vector<64x64xf32>
    %36 = vector.shape_cast %35 : vector<64x64xf32> to vector<1x1x64x64xf32>
    %c0_15 = arith.constant 0 : index
    %c0_16 = arith.constant 0 : index
    %c0_17 = arith.constant 0 : index
    %c0_18 = arith.constant 0 : index
    %37 = vector.load %arg6[%c0_15, %c0_16, %c0_17, %c0_18] : memref<1x1x64x64xf32, #tpu.memory_space<vmem>>, vector<1x1x64x64xf32>
    tpu.vector_store %arg6[%c0_15, %c0_16, %c0_17, %c0_18], %36 {strides = array<i32>} : memref<1x1x64x64xf32, #tpu.memory_space<vmem>>, vector<1x1x64x64xf32>,
    return
  }
  func.func @transform_0(%arg0: i32, %arg1: i32) -> (i32, i32, i32) {
    %c0_i32 = arith.constant 0 : i32
    %c0_i32_0 = arith.constant 0 : i32
    return %arg0, %c0_i32, %arg1 : i32, i32, i32
  }
  func.func @transform_1(%arg0: i32, %arg1: i32) -> (i32, i32) {
    %c0_i32 = arith.constant 0 : i32
    %c0_i32_0 = arith.constant 0 : i32
    %c0_i32_1 = arith.constant 0 : i32
    return %c0_i32, %c0_i32_0 : i32, i32
  }
  func.func @transform_2(%arg0: i32, %arg1: i32) -> (i32, i32) {
    %c0_i32 = arith.constant 0 : i32
    %c0_i32_0 = arith.constant 0 : i32
    %c0_i32_1 = arith.constant 0 : i32
    return %c0_i32, %c0_i32_0 : i32, i32
  }
  func.func @transform_3(%arg0: i32, %arg1: i32) -> (i32, i32, i32, i32) {
    %c0_i32 = arith.constant 0 : i32
    %c0_i32_0 = arith.constant 0 : i32
    %c0_i32_1 = arith.constant 0 : i32
    return %arg0, %arg1, %c0_i32, %c0_i32_0 : i32, i32, i32, i32
  }
  func.func @transform_4(%arg0: i32, %arg1: i32) -> (i32, i32, i32, i32) {
    %c0_i32 = arith.constant 0 : i32
    %c0_i32_0 = arith.constant 0 : i32
    %c0_i32_1 = arith.constant 0 : i32
    return %arg0, %arg1, %c0_i32, %c0_i32_0 : i32, i32, i32, i32
  }
}

</mosaic_0001>

<llo_original>
// kernel: tpu_custom_call.1
$region0: #{tpu_custom_call.1}
  #allocation0 [shape = 'u32[]', space=smem, size = 0x4, offset = 0x4, fixed_abs, tag = 'smem constant byte address 0x4 - core index']
  #allocation1 [shape = 'u32[144,128]{1,0:T(1,128)}', space=vmem, size = 0x12000, scoped, tag = 'internal scratch']
  %s0 = inlined_call_operand.vmem [shape: f32[2,4,256], index: 0, kind: input, shape index: {}]
  %s1 = inlined_call_operand.vmem [shape: f32[64,4], index: 1, kind: input, shape index: {}]
  %s2 = inlined_call_operand.vmem [shape: f32[64,1], index: 2, kind: input, shape index: {}]
  %s3 = inlined_call_operand.vmem [shape: f32[2,1,64,1], index: 3, kind: output, shape index: {0}]
  %s4 = inlined_call_operand.hbm [shape: f32[2,1,64,64], index: 4, kind: output, shape index: {1}]
  %5 = xla_tuple %s3, %s4
  %s6 = sld [smem:[#allocation0]]
  $region53: #{tpu_custom_call.1} parent=0
    _
  %s8 = ssub.s32 1, %s6
  %s9 = scalar_select 0, %s8, %s6
  $region1: #{tpu_custom_call.1} parent=0
    #allocation2 [shape = 'u8[65536]{0}', space=vmem, size = 0x10000, scoped, tag = 'output window, operand 1']
    #allocation3 [shape = 's32[2]{0}', space=sflag, size = 0x8, scoped, tag = 'scoped memory for tpu_custom_call.1']
    %10 = vsyncpa [#allocation3], 0
    %s11 = scalar_lea.sflag [#allocation3], 1
    %12 = vsyncpa %s11, 0
    loop: start=0, step=1, limit=4
    $region2: #{tpu_custom_call.1} parent=1 // loop_pre_header
      _
    $region3: #{tpu_custom_call.1} parent=1 // loop_header
      %s14 = sphi 0, %s18
      %p15 = scmp.ge.s32.totalorder %s14, 4
      %s21 = sphi 0, %s33
      %s22 = sphi 0, %s29
      %s23 = sphi 0, %s21
      %s24 = sphi 0, %s22
      %s25 = sphi 0, %s23
      %s26 = sphi 0, %s24
      %s38 = sphi 0, %s40
      %s41 = sphi 0, %s38
      %s42 = sphi 0, %s41
      %s58 = sphi 0, %s42
      %s62 = sphi 0, %s62
      %s64 = sphi 0, %s62
      %s65 = sphi 0, %s64
      %s79 = sphi 0, %s65
      %s83 = sphi 0, %s83
      %s85 = sphi 0, %s83
      %s86 = sphi 0, %s85
      %s100 = sphi 0, %s86
      %s108 = sphi 0, %s110
      %s111 = sphi 0, %s108
      %s112 = sphi 0, %s111
      %s128 = sphi 0, %s112
      %s136 = sphi 0, %s138
      %s139 = sphi 0, %s136
      %s140 = sphi 0, %s139
      %s156 = sphi 0, %s140
    $region4: #{tpu_custom_call.1} parent=1 // loop_header_branch
      %17 = sbr.rel (%p15) target = $region8
    $region5: #{tpu_custom_call.1} parent=1 // loop_body
      %s19 = ssub.s32 %s14, 1
      %s20 = ssub.s32 %s14, 2
      %s27 = sadd.s32 1, %s22
      %p28 = scmp.ge.s32.totalorder %s27, 1
      %s29 = scalar_select %p28, 0, %s27
      %s30 = sadd.s32 1, %s21
      %s31 = scalar_select %p28, %s30, %s21
      %p32 = scmp.ge.s32.totalorder %s31, 2
      %s33 = scalar_select %p32, 0, %s31
      %s34 = ssub.s32 %s21, %s33
      %s35 = ssub.s32 %s22, %s29
      %s36 = sor.u32 %s34, %s35
      %p37 = scmp.eq.s32.totalorder %s36, 0
      %s39 = sadd.s32 %s38, 1
      %s40 = scalar_select %p37, %s38, %s39
      %p43 = pneg %p37
      %p44 = scmp.eq.s32.totalorder %s14, 1
      %p45 = por %p43, %p44
      %p46 = scmp.ne.s32.totalorder %s38, %s41
      %p47 = scmp.eq.s32.totalorder %s14, 0
      %p48 = por %p46, %p47
      %p49 = scmp.ne.s32.totalorder %s38, %s41
      %p50 = scmp.eq.s32.totalorder %s19, 1
      %p51 = por %p49, %p50
      %p52 = scmp.ne.s32.totalorder %s41, %s42
      %p53 = scmp.eq.s32.totalorder %s19, 0
      %p54 = por %p52, %p53
      %p55 = scmp.ne.s32.totalorder %s41, %s42
      %p56 = scmp.eq.s32.totalorder %s20, 1
      %p57 = por %p55, %p56
      %p59 = scmp.ne.s32.totalorder %s42, %s58
      %p60 = scmp.eq.s32.totalorder %s20, 0
      %p61 = por %p59, %p60
      %s63 = sadd.s32 %s62, 1
      %p66 = scmp.eq.s32.totalorder %s14, 1
      %p67 = scmp.ne.s32.totalorder %s62, %s64
      %p68 = scmp.eq.s32.totalorder %s14, 0
      %p69 = por %p67, %p68
      %p70 = scmp.ne.s32.totalorder %s62, %s64
      %p71 = scmp.eq.s32.totalorder %s19, 1
      %p72 = por %p70, %p71
      %p73 = scmp.ne.s32.totalorder %s64, %s65
      %p74 = scmp.eq.s32.totalorder %s19, 0
      %p75 = por %p73, %p74
      %p76 = scmp.ne.s32.totalorder %s64, %s65
      %p77 = scmp.eq.s32.totalorder %s20, 1
      %p78 = por %p76, %p77
      %p80 = scmp.ne.s32.totalorder %s65, %s79
      %p81 = scmp.eq.s32.totalorder %s20, 0
      %p82 = por %p80, %p81
      %s84 = sadd.s32 %s83, 1
      %p87 = scmp.eq.s32.totalorder %s14, 1
      %p88 = scmp.ne.s32.totalorder %s83, %s85
      %p89 = scmp.eq.s32.totalorder %s14, 0
      %p90 = por %p88, %p89
      %p91 = scmp.ne.s32.totalorder %s83, %s85
      %p92 = scmp.eq.s32.totalorder %s19, 1
      %p93 = por %p91, %p92
      %p94 = scmp.ne.s32.totalorder %s85, %s86
      %p95 = scmp.eq.s32.totalorder %s19, 0
      %p96 = por %p94, %p95
      %p97 = scmp.ne.s32.totalorder %s85, %s86
      %p98 = scmp.eq.s32.totalorder %s20, 1
      %p99 = por %p97, %p98
      %p101 = scmp.ne.s32.totalorder %s86, %s100
      %p102 = scmp.eq.s32.totalorder %s20, 0
      %p103 = por %p101, %p102
      %s104 = ssub.s32 %s21, %s33
      %s105 = ssub.s32 %s22, %s29
      %s106 = sor.u32 %s104, %s105
      %p107 = scmp.eq.s32.totalorder %s106, 0
      %s109 = sadd.s32 %s108, 1
      %s110 = scalar_select %p107, %s108, %s109
      %p113 = pneg %p107
      %p114 = scmp.eq.s32.totalorder %s14, 1
      %p115 = por %p113, %p114
      %p116 = scmp.ne.s32.totalorder %s108, %s111
      %p117 = scmp.eq.s32.totalorder %s14, 0
      %p118 = por %p116, %p117
      %p119 = scmp.ne.s32.totalorder %s108, %s111
      %p120 = scmp.eq.s32.totalorder %s19, 1
      %p121 = por %p119, %p120
      %p122 = scmp.ne.s32.totalorder %s111, %s112
      %p123 = scmp.eq.s32.totalorder %s19, 0
      %p124 = por %p122, %p123
      %p125 = scmp.ne.s32.totalorder %s111, %s112
      %p126 = scmp.eq.s32.totalorder %s20, 1
      %p127 = por %p125, %p126
      %p129 = scmp.ne.s32.totalorder %s112, %s128
      %p130 = scmp.eq.s32.totalorder %s20, 0
      %p131 = por %p129, %p130
      %s132 = ssub.s32 %s21, %s33
      %s133 = ssub.s32 %s22, %s29
      %s134 = sor.u32 %s132, %s133
      %p135 = scmp.eq.s32.totalorder %s134, 0
      %s137 = sadd.s32 %s136, 1
      %s138 = scalar_select %p135, %s136, %s137
      %p141 = pneg %p135
      %p142 = scmp.eq.s32.totalorder %s14, 1
      %p143 = por %p141, %p142
      %p144 = scmp.ne.s32.totalorder %s136, %s139
      %p145 = scmp.eq.s32.totalorder %s14, 0
      %p146 = por %p144, %p145
      %p147 = scmp.ne.s32.totalorder %s136, %s139
      %p148 = scmp.eq.s32.totalorder %s19, 1
      %p149 = por %p147, %p148
      %p150 = scmp.ne.s32.totalorder %s139, %s140
      %p151 = scmp.eq.s32.totalorder %s19, 0
      %p152 = por %p150, %p151
      %p153 = scmp.ne.s32.totalorder %s139, %s140
      %p154 = scmp.eq.s32.totalorder %s20, 1
      %p155 = por %p153, %p154
      %p157 = scmp.ne.s32.totalorder %s140, %s156
      %p158 = scmp.eq.s32.totalorder %s20, 0
      %p159 = por %p157, %p158
      %p160 = scmp.le.s32.totalorder 1, %s14
      %p161 = scmp.lt.s32.totalorder %s14, 3
      %p162 = pnand %p160, %p161
      %p163 = pneg %p162
      // Predicated region
      $region9: #{tpu_custom_call.1} parent=5 // pred_check
        _
      $region10: #{tpu_custom_call.1} parent=5 // pred_check_branch
        %165 = sbr.rel (%p162) target = $region12
      $region11: #{tpu_custom_call.1} parent=5 // pred_region
        %s166 = ssub.s32 %s14, 1
        // Predicated region
        $region13: #{tpu_custom_call.1} parent=11 // pred_check
          %p167 = pneg %p75
        $region14: #{tpu_custom_call.1} parent=11 // pred_check_branch
          %169 = sbr.rel (%p167) target = $region16
        $region15: #{tpu_custom_call.1} parent=11 // pred_region
          _
        $region16: #{tpu_custom_call.1} parent=11 // pred_fallthru
          _
        // Predicated region
        $region17: #{tpu_custom_call.1} parent=11 // pred_check
          %p170 = pneg %p96
        $region18: #{tpu_custom_call.1} parent=11 // pred_check_branch
          %172 = sbr.rel (%p170) target = $region20
        $region19: #{tpu_custom_call.1} parent=11 // pred_region
          _
        $region20: #{tpu_custom_call.1} parent=11 // pred_fallthru
          _
      $region12: #{tpu_custom_call.1} parent=5 // pred_fallthru
        _
      %p173 = scmp.lt.s32.totalorder %s14, 2
      // Predicated region
      $region21: #{tpu_custom_call.1} parent=5 // pred_check
        %p174 = pneg %p173
      $region22: #{tpu_custom_call.1} parent=5 // pred_check_branch
        %176 = sbr.rel (%p174) target = $region24
      $region23: #{tpu_custom_call.1} parent=5 // pred_region
        // Predicated region
        $region25: #{tpu_custom_call.1} parent=23 // pred_check
          %p177 = pneg %p48
        $region26: #{tpu_custom_call.1} parent=23 // pred_check_branch
          %179 = sbr.rel (%p177) target = $region28
        $region27: #{tpu_custom_call.1} parent=23 // pred_region
          %s180 = smul.u32 2, %s22
          %p181 = scmp.lt.s32.totalorder %s21, 1
          %s182 = scalar_select %p181, %s21, 1
          %p183 = scmp.lt.s32.totalorder %s180, 1
          %s184 = scalar_select %p183, %s180, 1
          %s185 = smul.addr %s182, 2
          %s186 = sadd.s32 %s184, %s185
          %s187 = smul.addr %s186, 4
          %s188 = scalar_lea.vmem %s0, %s187
          %s189 = smul.u32 2, %s22
        $region28: #{tpu_custom_call.1} parent=23 // pred_fallthru
          _
      $region24: #{tpu_custom_call.1} parent=5 // pred_fallthru
        _
      %p190 = scmp.le.s32.totalorder 1, %s14
      %p191 = scmp.lt.s32.totalorder %s14, 3
      %p192 = pnand %p190, %p191
      %p193 = pneg %p192
      // Predicated region
      $region29: #{tpu_custom_call.1} parent=5 // pred_check
        _
      $region30: #{tpu_custom_call.1} parent=5 // pred_check_branch
        %195 = sbr.rel (%p192) target = $region32
      $region31: #{tpu_custom_call.1} parent=5 // pred_region
        %s196 = ssub.s32 %s14, 1
        %s197 = smul.u32 2, %s24
        %p198 = scmp.lt.s32.totalorder %s23, 1
        %s199 = scalar_select %p198, %s23, 1
        %p200 = scmp.lt.s32.totalorder %s197, 1
        %s201 = scalar_select %p200, %s197, 1
        %s202 = smul.addr %s199, 2
        %s203 = sadd.s32 %s201, %s202
        %s204 = smul.addr %s203, 4
        %s205 = scalar_lea.vmem %s0, %s204
        %p206 = pneg %p54
        %p207 = pneg %p51
        %p208 = pneg %p75
        %p209 = pneg %p72
        %p210 = pneg %p96
        %p211 = pneg %p93
        %p212 = pneg %p124
        %p213 = pneg %p121
        %p214 = scmp.lt.s32.totalorder %s23, 1
        %s215 = scalar_select %p214, %s23, 1
        %p216 = scmp.lt.s32.totalorder %s24, 0
        %s217 = scalar_select %p216, %s24, 0
        %s218 = smul.addr %s217, 8
        %s219 = smul.addr %s215, 8
        %s220 = sadd.s32 %s218, %s219
        %s221 = smul.addr %s220, 8
        %s222 = scalar_lea.vmem %s3, %s221
        %p223 = pneg %p152
        %p224 = pneg %p149
        %s225 = sand.u32 %s139, 1
        %s226 = scalar_lea.sflag [#allocation3], %s225
        %s227 = sand.u32 %s139, 1
        %s228 = smul.addr %s227, 64
        %s229 = scalar_lea.vmem [#allocation2], %s228
        %s230 = smul.u32 2, %s24
        %p231 = scmp.lt.s32.totalorder %s23, 1
        %s232 = scalar_select %p231, %s23, 1
        %p233 = scmp.lt.s32.totalorder %s230, 1
        %s234 = scalar_select %p233, %s230, 1
        %s235 = smul.addr %s232, 2
        %s236 = sadd.s32 %s234, %s235
        %s237 = smul.addr %s236, 4
        %s238 = scalar_lea.vmem %s0, %s237
        %s239 = smul.u32 2, %s24
        %p240 = scmp.lt.s32.totalorder %s23, 1
        %s241 = scalar_select %p240, %s23, 1
        %p242 = scmp.lt.s32.totalorder %s24, 0
        %s243 = scalar_select %p242, %s24, 0
        %s244 = smul.addr %s243, 8
        %s245 = smul.addr %s241, 8
        %s246 = sadd.s32 %s244, %s245
        %s247 = smul.addr %s246, 8
        %s248 = scalar_lea.vmem %s3, %s247
        %v249 = vld [vmem:[%s238] sm:$0xff]
        %v250 = vld [vmem:[%s1] sm:$0xff]
        %v251 = vld [vmem:[%s1 + $0x8] sm:$0xff]
        %v252 = vld [vmem:[%s1 + $0x10] sm:$0xff]
        %v253 = vld [vmem:[%s1 + $0x18] sm:$0xff]
        %v254 = vld [vmem:[%s1 + $0x20] sm:$0xff]
        %v255 = vld [vmem:[%s1 + $0x28] sm:$0xff]
        %v256 = vld [vmem:[%s1 + $0x30] sm:$0xff]
        %v257 = vld [vmem:[%s1 + $0x38] sm:$0xff]
        %259 = vset.pattern.permute.xlu0 0
        %260 = vperm.xlu0 %259, %v250
        %v261 = vpop.permute.xlu0 %260
        %264 = vset.pattern.permute.xlu0 0
        %265 = vperm.xlu0 %264, %v251
        %v266 = vpop.permute.xlu0 %265
        %269 = vset.pattern.permute.xlu0 0
        %270 = vperm.xlu0 %269, %v252
        %v271 = vpop.permute.xlu0 %270
        %274 = vset.pattern.permute.xlu0 0
        %275 = vperm.xlu0 %274, %v253
        %v276 = vpop.permute.xlu0 %275
        %279 = vset.pattern.permute.xlu0 0
        %280 = vperm.xlu0 %279, %v254
        %v281 = vpop.permute.xlu0 %280
        %284 = vset.pattern.permute.xlu0 0
        %285 = vperm.xlu0 %284, %v255
        %v286 = vpop.permute.xlu0 %285
        %289 = vset.pattern.permute.xlu0 0
        %290 = vperm.xlu0 %289, %v256
        %v291 = vpop.permute.xlu0 %290
        %294 = vset.pattern.permute.xlu0 0
        %295 = vperm.xlu0 %294, %v257
        %v296 = vpop.permute.xlu0 %295
        %v299 = vlaneseq
        %v300 = vshrl.u32 %v299, 7
        %v301 = vsub.s32 0, %v300
        %v302 = vrot.slane %v249, %v301
        %v303 = vlaneseq
        %v304 = vshrl.u32 %v303, 7
        %v305 = vsub.s32 4, %v304
        %v306 = vrot.slane %v249, %v305
        %v309 = vlaneseq
        %v310 = vshrl.u32 %v309, 7
        %v311 = vsub.s32 0, %v310
        %v312 = vrot.slane %v302, %v311
        %v313 = vlaneseq
        %v314 = vshrl.u32 %v313, 7
        %v315 = vsub.s32 0, %v314
        %v316 = vrot.slane %v306, %v315
        %v317 = vmul.f32 %v261, %v312
        %v318 = vmul.f32 %v261, %v316
        %v319 = vmul.f32 %v266, %v312
        %v320 = vmul.f32 %v266, %v316
        %v321 = vmul.f32 %v271, %v312
        %v322 = vmul.f32 %v271, %v316
        %v323 = vmul.f32 %v276, %v312
        %v324 = vmul.f32 %v276, %v316
        %v325 = vmul.f32 %v281, %v312
        %v326 = vmul.f32 %v281, %v316
        %v327 = vmul.f32 %v286, %v312
        %v328 = vmul.f32 %v286, %v316
        %v329 = vmul.f32 %v291, %v312
        %v330 = vmul.f32 %v291, %v316
        %v331 = vmul.f32 %v296, %v312
        %v332 = vmul.f32 %v296, %v316
        %333 = vset.pattern.permute.xlu0 1
        %334 = vperm.xlu0 %333, %v250
        %v335 = vpop.permute.xlu0 %334
        %337 = vset.pattern.permute.xlu0 1
        %338 = vperm.xlu0 %337, %v251
        %v339 = vpop.permute.xlu0 %338
        %341 = vset.pattern.permute.xlu0 1
        %342 = vperm.xlu0 %341, %v252
        %v343 = vpop.permute.xlu0 %342
        %345 = vset.pattern.permute.xlu0 1
        %346 = vperm.xlu0 %345, %v253
        %v347 = vpop.permute.xlu0 %346
        %349 = vset.pattern.permute.xlu0 1
        %350 = vperm.xlu0 %349, %v254
        %v351 = vpop.permute.xlu0 %350
        %353 = vset.pattern.permute.xlu0 1
        %354 = vperm.xlu0 %353, %v255
        %v355 = vpop.permute.xlu0 %354
        %357 = vset.pattern.permute.xlu0 1
        %358 = vperm.xlu0 %357, %v256
        %v359 = vpop.permute.xlu0 %358
        %361 = vset.pattern.permute.xlu0 1
        %362 = vperm.xlu0 %361, %v257
        %v363 = vpop.permute.xlu0 %362
        %v365 = vlaneseq
        %v366 = vshrl.u32 %v365, 7
        %v367 = vsub.s32 1, %v366
        %v368 = vrot.slane %v249, %v367
        %v369 = vlaneseq
        %v370 = vshrl.u32 %v369, 7
        %v371 = vsub.s32 5, %v370
        %v372 = vrot.slane %v249, %v371
        %v375 = vlaneseq
        %v376 = vshrl.u32 %v375, 7
        %v377 = vsub.s32 1, %v376
        %v378 = vrot.slane %v368, %v377
        %v379 = vlaneseq
        %v380 = vshrl.u32 %v379, 7
        %v381 = vsub.s32 1, %v380
        %v382 = vrot.slane %v372, %v381
        %v383 = vmul.f32 %v335, %v378
        %v384 = vmul.f32 %v335, %v382
        %v385 = vmul.f32 %v339, %v378
        %v386 = vmul.f32 %v339, %v382
        %v387 = vmul.f32 %v343, %v378
        %v388 = vmul.f32 %v343, %v382
        %v389 = vmul.f32 %v347, %v378
        %v390 = vmul.f32 %v347, %v382
        %v391 = vmul.f32 %v351, %v378
        %v392 = vmul.f32 %v351, %v382
        %v393 = vmul.f32 %v355, %v378
        %v394 = vmul.f32 %v355, %v382
        %v395 = vmul.f32 %v359, %v378
        %v396 = vmul.f32 %v359, %v382
        %v397 = vmul.f32 %v363, %v378
        %v398 = vmul.f32 %v363, %v382
        %v399 = vadd.f32 %v317, %v383
        %v400 = vadd.f32 %v318, %v384
        %v401 = vadd.f32 %v319, %v385
        %v402 = vadd.f32 %v320, %v386
        %v403 = vadd.f32 %v321, %v387
        %v404 = vadd.f32 %v322, %v388
        %v405 = vadd.f32 %v323, %v389
        %v406 = vadd.f32 %v324, %v390
        %v407 = vadd.f32 %v325, %v391
        %v408 = vadd.f32 %v326, %v392
        %v409 = vadd.f32 %v327, %v393
        %v410 = vadd.f32 %v328, %v394
        %v411 = vadd.f32 %v329, %v395
        %v412 = vadd.f32 %v330, %v396
        %v413 = vadd.f32 %v331, %v397
        %v414 = vadd.f32 %v332, %v398
        %415 = vset.pattern.permute.xlu0 2
        %416 = vperm.xlu0 %415, %v250
        %v417 = vpop.permute.xlu0 %416
        %419 = vset.pattern.permute.xlu0 2
        %420 = vperm.xlu0 %419, %v251
        %v421 = vpop.permute.xlu0 %420
        %423 = vset.pattern.permute.xlu0 2
        %424 = vperm.xlu0 %423, %v252
        %v425 = vpop.permute.xlu0 %424
        %427 = vset.pattern.permute.xlu0 2
        %428 = vperm.xlu0 %427, %v253
        %v429 = vpop.permute.xlu0 %428
        %431 = vset.pattern.permute.xlu0 2
        %432 = vperm.xlu0 %431, %v254
        %v433 = vpop.permute.xlu0 %432
        %435 = vset.pattern.permute.xlu0 2
        %436 = vperm.xlu0 %435, %v255
        %v437 = vpop.permute.xlu0 %436
        %439 = vset.pattern.permute.xlu0 2
        %440 = vperm.xlu0 %439, %v256
        %v441 = vpop.permute.xlu0 %440
        %443 = vset.pattern.permute.xlu0 2
        %444 = vperm.xlu0 %443, %v257
        %v445 = vpop.permute.xlu0 %444
        %v447 = vlaneseq
        %v448 = vshrl.u32 %v447, 7
        %v449 = vsub.s32 2, %v448
        %v450 = vrot.slane %v249, %v449
        %v451 = vlaneseq
        %v452 = vshrl.u32 %v451, 7
        %v453 = vsub.s32 6, %v452
        %v454 = vrot.slane %v249, %v453
        %v457 = vlaneseq
        %v458 = vshrl.u32 %v457, 7
        %v459 = vsub.s32 2, %v458
        %v460 = vrot.slane %v450, %v459
        %v461 = vlaneseq
        %v462 = vshrl.u32 %v461, 7
        %v463 = vsub.s32 2, %v462
        %v464 = vrot.slane %v454, %v463
        %v465 = vmul.f32 %v417, %v460
        %v466 = vmul.f32 %v417, %v464
        %v467 = vmul.f32 %v421, %v460
        %v468 = vmul.f32 %v421, %v464
        %v469 = vmul.f32 %v425, %v460
        %v470 = vmul.f32 %v425, %v464
        %v471 = vmul.f32 %v429, %v460
        %v472 = vmul.f32 %v429, %v464
        %v473 = vmul.f32 %v433, %v460
        %v474 = vmul.f32 %v433, %v464
        %v475 = vmul.f32 %v437, %v460
        %v476 = vmul.f32 %v437, %v464
        %v477 = vmul.f32 %v441, %v460
        %v478 = vmul.f32 %v441, %v464
        %v479 = vmul.f32 %v445, %v460
        %v480 = vmul.f32 %v445, %v464
        %v481 = vadd.f32 %v399, %v465
        %v482 = vadd.f32 %v400, %v466
        %v483 = vadd.f32 %v401, %v467
        %v484 = vadd.f32 %v402, %v468
        %v485 = vadd.f32 %v403, %v469
        %v486 = vadd.f32 %v404, %v470
        %v487 = vadd.f32 %v405, %v471
        %v488 = vadd.f32 %v406, %v472
        %v489 = vadd.f32 %v407, %v473
        %v490 = vadd.f32 %v408, %v474
        %v491 = vadd.f32 %v409, %v475
        %v492 = vadd.f32 %v410, %v476
        %v493 = vadd.f32 %v411, %v477
        %v494 = vadd.f32 %v412, %v478
        %v495 = vadd.f32 %v413, %v479
        %v496 = vadd.f32 %v414, %v480
        %497 = vset.pattern.permute.xlu0 3
        %498 = vperm.xlu0 %497, %v250
        %v499 = vpop.permute.xlu0 %498
        %501 = vset.pattern.permute.xlu0 3
        %502 = vperm.xlu0 %501, %v251
        %v503 = vpop.permute.xlu0 %502
        %505 = vset.pattern.permute.xlu0 3
        %506 = vperm.xlu0 %505, %v252
        %v507 = vpop.permute.xlu0 %506
        %509 = vset.pattern.permute.xlu0 3
        %510 = vperm.xlu0 %509, %v253
        %v511 = vpop.permute.xlu0 %510
        %513 = vset.pattern.permute.xlu0 3
        %514 = vperm.xlu0 %513, %v254
        %v515 = vpop.permute.xlu0 %514
        %517 = vset.pattern.permute.xlu0 3
        %518 = vperm.xlu0 %517, %v255
        %v519 = vpop.permute.xlu0 %518
        %521 = vset.pattern.permute.xlu0 3
        %522 = vperm.xlu0 %521, %v256
        %v523 = vpop.permute.xlu0 %522
        %525 = vset.pattern.permute.xlu0 3
        %526 = vperm.xlu0 %525, %v257
        %v527 = vpop.permute.xlu0 %526
        %v529 = vlaneseq
        %v530 = vshrl.u32 %v529, 7
        %v531 = vsub.s32 3, %v530
        %v532 = vrot.slane %v249, %v531
        %v533 = vlaneseq
        %v534 = vshrl.u32 %v533, 7
        %v535 = vsub.s32 7, %v534
        %v536 = vrot.slane %v249, %v535
        %v539 = vlaneseq
        %v540 = vshrl.u32 %v539, 7
        %v541 = vsub.s32 3, %v540
        %v542 = vrot.slane %v532, %v541
        %v543 = vlaneseq
        %v544 = vshrl.u32 %v543, 7
        %v545 = vsub.s32 3, %v544
        %v546 = vrot.slane %v536, %v545
        %v547 = vmul.f32 %v499, %v542
        %v548 = vmul.f32 %v499, %v546
        %v549 = vmul.f32 %v503, %v542
        %v550 = vmul.f32 %v503, %v546
        %v551 = vmul.f32 %v507, %v542
        %v552 = vmul.f32 %v507, %v546
        %v553 = vmul.f32 %v511, %v542
        %v554 = vmul.f32 %v511, %v546
        %v555 = vmul.f32 %v515, %v542
        %v556 = vmul.f32 %v515, %v546
        %v557 = vmul.f32 %v519, %v542
        %v558 = vmul.f32 %v519, %v546
        %v559 = vmul.f32 %v523, %v542
        %v560 = vmul.f32 %v523, %v546
        %v561 = vmul.f32 %v527, %v542
        %v562 = vmul.f32 %v527, %v546
        %v563 = vadd.f32 %v481, %v547
        %v564 = vadd.f32 %v482, %v548
        %v565 = vadd.f32 %v483, %v549
        %v566 = vadd.f32 %v484, %v550
        %v567 = vadd.f32 %v485, %v551
        %v568 = vadd.f32 %v486, %v552
        %v569 = vadd.f32 %v487, %v553
        %v570 = vadd.f32 %v488, %v554
        %v571 = vadd.f32 %v489, %v555
        %v572 = vadd.f32 %v490, %v556
        %v573 = vadd.f32 %v491, %v557
        %v574 = vadd.f32 %v492, %v558
        %v575 = vadd.f32 %v493, %v559
        %v576 = vadd.f32 %v494, %v560
        %v577 = vadd.f32 %v495, %v561
        %v578 = vadd.f32 %v496, %v562
        %v579 = vld [vmem:[%s2] sm:$0xff]
        %v580 = vld [vmem:[%s2 + $0x8] sm:$0xff]
        %v581 = vld [vmem:[%s2 + $0x10] sm:$0xff]
        %v582 = vld [vmem:[%s2 + $0x18] sm:$0xff]
        %v583 = vld [vmem:[%s2 + $0x20] sm:$0xff]
        %v584 = vld [vmem:[%s2 + $0x28] sm:$0xff]
        %v585 = vld [vmem:[%s2 + $0x30] sm:$0xff]
        %v586 = vld [vmem:[%s2 + $0x38] sm:$0xff]
        %588 = vset.pattern.permute.xlu0 0
        %589 = vperm.xlu0 %588, %v579
        %v590 = vpop.permute.xlu0 %589
        %593 = vset.pattern.permute.xlu0 0
        %594 = vperm.xlu0 %593, %v580
        %v595 = vpop.permute.xlu0 %594
        %598 = vset.pattern.permute.xlu0 0
        %599 = vperm.xlu0 %598, %v581
        %v600 = vpop.permute.xlu0 %599
        %603 = vset.pattern.permute.xlu0 0
        %604 = vperm.xlu0 %603, %v582
        %v605 = vpop.permute.xlu0 %604
        %608 = vset.pattern.permute.xlu0 0
        %609 = vperm.xlu0 %608, %v583
        %v610 = vpop.permute.xlu0 %609
        %613 = vset.pattern.permute.xlu0 0
        %614 = vperm.xlu0 %613, %v584
        %v615 = vpop.permute.xlu0 %614
        %618 = vset.pattern.permute.xlu0 0
        %619 = vperm.xlu0 %618, %v585
        %v620 = vpop.permute.xlu0 %619
        %623 = vset.pattern.permute.xlu0 0
        %624 = vperm.xlu0 %623, %v586
        %v625 = vpop.permute.xlu0 %624
        %v627 = vadd.f32 %v563, %v590
        %v628 = vadd.f32 %v564, %v590
        %v629 = vadd.f32 %v565, %v595
        %v630 = vadd.f32 %v566, %v595
        %v631 = vadd.f32 %v567, %v600
        %v632 = vadd.f32 %v568, %v600
        %v633 = vadd.f32 %v569, %v605
        %v634 = vadd.f32 %v570, %v605
        %v635 = vadd.f32 %v571, %v610
        %v636 = vadd.f32 %v572, %v610
        %v637 = vadd.f32 %v573, %v615
        %v638 = vadd.f32 %v574, %v615
        %v639 = vadd.f32 %v575, %v620
        %v640 = vadd.f32 %v576, %v620
        %v641 = vadd.f32 %v577, %v625
        %v642 = vadd.f32 %v578, %v625
        %v643 = vmul.f32 %v627, 0.2
        %v644 = vmul.f32 %v628, 0.2
        %v645 = vmul.f32 %v629, 0.2
        %v646 = vmul.f32 %v630, 0.2
        %v647 = vmul.f32 %v631, 0.2
        %v648 = vmul.f32 %v632, 0.2
        %v649 = vmul.f32 %v633, 0.2
        %v650 = vmul.f32 %v634, 0.2
        %v651 = vmul.f32 %v635, 0.2
        %v652 = vmul.f32 %v636, 0.2
        %v653 = vmul.f32 %v637, 0.2
        %v654 = vmul.f32 %v638, 0.2
        %v655 = vmul.f32 %v639, 0.2
        %v656 = vmul.f32 %v640, 0.2
        %v657 = vmul.f32 %v641, 0.2
        %v658 = vmul.f32 %v642, 0.2
        %v659 = vmax.f32 %v627, %v643
        %v660 = vmax.f32 %v628, %v644
        %v661 = vmax.f32 %v629, %v645
        %v662 = vmax.f32 %v630, %v646
        %v663 = vmax.f32 %v631, %v647
        %v664 = vmax.f32 %v632, %v648
        %v665 = vmax.f32 %v633, %v649
        %v666 = vmax.f32 %v634, %v650
        %v667 = vmax.f32 %v635, %v651
        %v668 = vmax.f32 %v636, %v652
        %v669 = vmax.f32 %v637, %v653
        %v670 = vmax.f32 %v638, %v654
        %v671 = vmax.f32 %v639, %v655
        %v672 = vmax.f32 %v640, %v656
        %v673 = vmax.f32 %v641, %v657
        %v674 = vmax.f32 %v642, %v658
        %v675 = vadd.f32 %v659, %v660
        %676 = vadd.xlane.f32.xlu0 %v675
        %v677 = vpop.xlane.xlu0 %676
        %v678 = vadd.f32 %v661, %v662
        %679 = vadd.xlane.f32.xlu0 %v678
        %v680 = vpop.xlane.xlu0 %679
        %v681 = vadd.f32 %v663, %v664
        %682 = vadd.xlane.f32.xlu0 %v681
        %v683 = vpop.xlane.xlu0 %682
        %v684 = vadd.f32 %v665, %v666
        %685 = vadd.xlane.f32.xlu0 %v684
        %v686 = vpop.xlane.xlu0 %685
        %v687 = vadd.f32 %v667, %v668
        %688 = vadd.xlane.f32.xlu0 %v687
        %v689 = vpop.xlane.xlu0 %688
        %v690 = vadd.f32 %v669, %v670
        %691 = vadd.xlane.f32.xlu0 %v690
        %v692 = vpop.xlane.xlu0 %691
        %v693 = vadd.f32 %v671, %v672
        %694 = vadd.xlane.f32.xlu0 %v693
        %v695 = vpop.xlane.xlu0 %694
        %v696 = vadd.f32 %v673, %v674
        %697 = vadd.xlane.f32.xlu0 %v696
        %v698 = vpop.xlane.xlu0 %697
        %vm699 = vcmask 7168
        %700 = vst.msk [vmem:[%s248] sm:$0xff] %vm699, %v677
        %701 = vst.msk [vmem:[%s248 + $0x8] sm:$0xff] %vm699, %v680
        %702 = vst.msk [vmem:[%s248 + $0x10] sm:$0xff] %vm699, %v683
        %703 = vst.msk [vmem:[%s248 + $0x18] sm:$0xff] %vm699, %v686
        %704 = vst.msk [vmem:[%s248 + $0x20] sm:$0xff] %vm699, %v689
        %705 = vst.msk [vmem:[%s248 + $0x28] sm:$0xff] %vm699, %v692
        %706 = vst.msk [vmem:[%s248 + $0x30] sm:$0xff] %vm699, %v695
        %707 = vst.msk [vmem:[%s248 + $0x38] sm:$0xff] %vm699, %v698
        %708 = vmatprep.subr.mxu0 %v660
        %709 = vmatpush1.xpose.msra.mxu0 %v659
        %710 = vmatprep.subr.mxu0 %v662
        %711 = vmatpush1.xpose.msra.mxu0 %v661
        %712 = vmatprep.subr.mxu0 %v664
        %713 = vmatpush1.xpose.msra.mxu0 %v663
        %714 = vmatprep.subr.mxu0 %v666
        %715 = vmatpush1.xpose.msra.mxu0 %v665
        %716 = vmatprep.subr.mxu0 %v668
        %717 = vmatpush1.xpose.msra.mxu0 %v667
        %718 = vmatprep.subr.mxu0 %v670
        %719 = vmatpush1.xpose.msra.mxu0 %v669
        %720 = vmatprep.subr.mxu0 %v672
        %721 = vmatpush1.xpose.msra.mxu0 %v671
        %722 = vmatprep.subr.mxu0 %v674
        %723 = vmatpush1.xpose.msra.mxu0 %v673
        %724 = vmatprep.subr.mxu0 0.0
        %725 = vmatpush1.xpose.msra.mxu0 0.0
        %726 = vmatprep.subr.mxu0 0.0
        %727 = vmatpush1.xpose.msra.mxu0 0.0
        %728 = vmatprep.subr.mxu0 0.0
        %729 = vmatpush1.xpose.msra.mxu0 0.0
        %730 = vmatprep.subr.mxu0 0.0
        %731 = vmatpush1.xpose.msra.mxu0 0.0
        %732 = vmatprep.subr.mxu0 0.0
        %733 = vmatpush1.xpose.msra.mxu0 0.0
        %734 = vmatprep.subr.mxu0 0.0
        %735 = vmatpush1.xpose.msra.mxu0 0.0
        %736 = vmatprep.subr.mxu0 0.0
        %737 = vmatpush1.xpose.msra.mxu0 0.0
        %738 = vmatprep.subr.mxu0 0.0
        %739 = vmatpush1.xpose.msra.mxu0 0.0
        %740 = vmatprep.subr.mxu0 0.0
        %741 = vmatpush1.xpose.msra.mxu0 0.0
        %742 = vmatprep.subr.mxu0 0.0
        %743 = vmatpush1.xpose.msra.mxu0 0.0
        %744 = vmatprep.subr.mxu0 0.0
        %745 = vmatpush1.xpose.msra.mxu0 0.0
        %746 = vmatprep.subr.mxu0 0.0
        %747 = vmatpush1.xpose.msra.mxu0 0.0
        %748 = vmatprep.subr.mxu0 0.0
        %749 = vmatpush1.xpose.msra.mxu0 0.0
        %750 = vmatprep.subr.mxu0 0.0
        %751 = vmatpush1.xpose.msra.mxu0 0.0
        %752 = vmatprep.subr.mxu0 0.0
        %753 = vmatpush1.xpose.msra.mxu0 0.0
        %754 = vmatprep.subr.mxu0 0.0
        %755 = vmatpush1.xpose.msra.mxu0 0.0
        %756 = vmatprep.subr.mxu0 0.0
        %757 = vmatpush1.xpose.msra.mxu0 0.0
        %758 = vmatprep.subr.mxu0 0.0
        %759 = vmatpush1.xpose.msra.mxu0 0.0
        %760 = vmatprep.subr.mxu0 0.0
        %761 = vmatpush1.xpose.msra.mxu0 0.0
        %762 = vmatprep.subr.mxu0 0.0
        %763 = vmatpush1.xpose.msra.mxu0 0.0
        %764 = vmatprep.subr.mxu0 0.0
        %765 = vmatpush1.xpose.msra.mxu0 0.0
        %766 = vmatprep.subr.mxu0 0.0
        %767 = vmatpush1.xpose.msra.mxu0 0.0
        %768 = vmatprep.subr.mxu0 0.0
        %769 = vmatpush1.xpose.msra.mxu0 0.0
        %770 = vmatprep.subr.mxu0 0.0
        %771 = vmatpush1.xpose.msra.mxu0 0.0
        %772 = vmatprep.mubr.f32.mxu0 %v660
        %773 = vmatmul.mubr.f32.gmra.mrb[0].mxu0 %v659
        %v774 = vpop.f32.mrb[0].mxu0
        %v775 = vadd.f32 0.0, %v774
        %v776 = vpop.f32.mrb[0].mxu0
        %777 = vmatprep.mubr.f32.mxu0 %v662
        %778 = vmatmul.mubr.f32.gmra.mrb[0].mxu0 %v661
        %v779 = vpop.f32.mrb[0].mxu0
        %v780 = vadd.f32 0.0, %v779
        %v781 = vpop.f32.mrb[0].mxu0
        %782 = vmatprep.mubr.f32.mxu0 %v664
        %783 = vmatmul.mubr.f32.gmra.mrb[0].mxu0 %v663
        %v784 = vpop.f32.mrb[0].mxu0
        %v785 = vadd.f32 0.0, %v784
        %v786 = vpop.f32.mrb[0].mxu0
        %787 = vmatprep.mubr.f32.mxu0 %v666
        %788 = vmatmul.mubr.f32.gmra.mrb[0].mxu0 %v665
        %v789 = vpop.f32.mrb[0].mxu0
        %v790 = vadd.f32 0.0, %v789
        %v791 = vpop.f32.mrb[0].mxu0
        %792 = vmatprep.mubr.f32.mxu0 %v668
        %793 = vmatmul.mubr.f32.gmra.mrb[0].mxu0 %v667
        %v794 = vpop.f32.mrb[0].mxu0
        %v795 = vadd.f32 0.0, %v794
        %v796 = vpop.f32.mrb[0].mxu0
        %797 = vmatprep.mubr.f32.mxu0 %v670
        %798 = vmatmul.mubr.f32.gmra.mrb[0].mxu0 %v669
        %v799 = vpop.f32.mrb[0].mxu0
        %v800 = vadd.f32 0.0, %v799
        %v801 = vpop.f32.mrb[0].mxu0
        %802 = vmatprep.mubr.f32.mxu0 %v672
        %803 = vmatmul.mubr.f32.gmra.mrb[0].mxu0 %v671
        %v804 = vpop.f32.mrb[0].mxu0
        %v805 = vadd.f32 0.0, %v804
        %v806 = vpop.f32.mrb[0].mxu0
        %807 = vmatprep.mubr.f32.mxu0 %v674
        %808 = vmatmul.mubr.f32.gmra.mrb[0].mxu0 %v673
        %v809 = vpop.f32.mrb[0].mxu0
        %v810 = vadd.f32 0.0, %v809
        %v811 = vpop.f32.mrb[0].mxu0
        %812 = vdwg.mxu0
        %vm813 = vcmask 523264
        %814 = vst.msk [vmem:[%s229] sm:$0xff] %vm813, %v775
        %815 = vst.msk [vmem:[%s229 + $0x8] sm:$0xff] %vm813, %v780
        %816 = vst.msk [vmem:[%s229 + $0x10] sm:$0xff] %vm813, %v785
        %817 = vst.msk [vmem:[%s229 + $0x18] sm:$0xff] %vm813, %v790
        %818 = vst.msk [vmem:[%s229 + $0x20] sm:$0xff] %vm813, %v795
        %819 = vst.msk [vmem:[%s229 + $0x28] sm:$0xff] %vm813, %v800
        %820 = vst.msk [vmem:[%s229 + $0x30] sm:$0xff] %vm813, %v805
        %821 = vst.msk [vmem:[%s229 + $0x38] sm:$0xff] %vm813, %v810
        %p822 = scmp.lt.s32.totalorder %s23, 1
        %s823 = scalar_select %p822, %s23, 1
        %p824 = scmp.lt.s32.totalorder %s24, 0
        %s825 = scalar_select %p824, %s24, 0
        %s826 = smul.addr %s825, 8
        %s827 = smul.addr %s823, 8
        %s828 = sadd.s32 %s826, %s827
        %s829 = smul.addr %s828, 8
        %s830 = scalar_lea.vmem %s3, %s829
        %s831 = sand.u32 %s139, 1
        %s832 = scalar_lea.sflag [#allocation3], %s831
        %s833 = sand.u32 %s139, 1
        %s834 = smul.addr %s833, 64
        %s835 = scalar_lea.vmem [#allocation2], %s834
        // Predicated region
        $region33: #{tpu_custom_call.1} parent=31 // pred_check
          %p836 = pneg %p121
        $region34: #{tpu_custom_call.1} parent=31 // pred_check_branch
          %838 = sbr.rel (%p836) target = $region36
        $region35: #{tpu_custom_call.1} parent=31 // pred_region
          _
        $region36: #{tpu_custom_call.1} parent=31 // pred_fallthru
          _
        // Predicated region
        $region37: #{tpu_custom_call.1} parent=31 // pred_check
          %p839 = pneg %p149
        $region38: #{tpu_custom_call.1} parent=31 // pred_check_branch
          %841 = sbr.rel (%p839) target = $region40
        $region39: #{tpu_custom_call.1} parent=31 // pred_region
          %s843 = ssub.s32 1024, 1024
          %844 = vsyncadd %s832, %s843
          %s845 = smul.addr %s24, 8
          %s846 = smul.addr %s23, 8
          %s847 = sadd.s32 %s845, %s846
          %s848 = smul.addr %s847, 128
          %s849 = scalar_lea.hbm %s4, %s848
          %s850 = sshll.u32 %s835, 4
          %s851 = int_to_ptr.vmem [resolvable:$true] %s850
          %856 = dma.vmem_to_hbm [thread:$0]  %s851, 1024, %s849, %s832, 128, 128, 8
        $region40: #{tpu_custom_call.1} parent=31 // pred_fallthru
          _
      $region32: #{tpu_custom_call.1} parent=5 // pred_fallthru
        _
      %p857 = scmp.le.s32.totalorder 2, %s14
      // Predicated region
      $region41: #{tpu_custom_call.1} parent=5 // pred_check
        %p858 = pneg %p857
      $region42: #{tpu_custom_call.1} parent=5 // pred_check_branch
        %860 = sbr.rel (%p858) target = $region44
      $region43: #{tpu_custom_call.1} parent=5 // pred_region
        %s861 = ssub.s32 %s14, 2
        // Predicated region
        $region45: #{tpu_custom_call.1} parent=43 // pred_check
          %p862 = pneg %p127
        $region46: #{tpu_custom_call.1} parent=43 // pred_check_branch
          %864 = sbr.rel (%p862) target = $region48
        $region47: #{tpu_custom_call.1} parent=43 // pred_region
          %p865 = scmp.lt.s32.totalorder %s25, 1
          %s866 = scalar_select %p865, %s25, 1
          %p867 = scmp.lt.s32.totalorder %s26, 0
          %s868 = scalar_select %p867, %s26, 0
          %s869 = smul.addr %s868, 8
          %s870 = smul.addr %s866, 8
          %s871 = sadd.s32 %s869, %s870
          %s872 = smul.addr %s871, 8
          %s873 = scalar_lea.vmem %s3, %s872
        $region48: #{tpu_custom_call.1} parent=43 // pred_fallthru
          _
        // Predicated region
        $region49: #{tpu_custom_call.1} parent=43 // pred_check
          %p874 = pneg %p155
        $region50: #{tpu_custom_call.1} parent=43 // pred_check_branch
          %876 = sbr.rel (%p874) target = $region52
        $region51: #{tpu_custom_call.1} parent=43 // pred_region
          %s877 = sand.u32 %s140, 1
          %s878 = scalar_lea.sflag [#allocation3], %s877
          %s879 = sand.u32 %s140, 1
          %s880 = smul.addr %s879, 64
          %s881 = scalar_lea.vmem [#allocation2], %s880
          %882 = dma.done %s878, 1024
        $region52: #{tpu_custom_call.1} parent=43 // pred_fallthru
          _
      $region44: #{tpu_custom_call.1} parent=5 // pred_fallthru
        _
    $region6: #{tpu_custom_call.1} parent=1 // loop_footer
      %s18 = sadd.s32 1, %s14
    $region7: #{tpu_custom_call.1} parent=1 // loop_footer_branch
      %13 = sbr.rel target = $region3
    $region8: #{tpu_custom_call.1} parent=1 // loop_exit
      _
    %883 = vsyncpa [#allocation3], 1
    %s884 = scalar_lea.sflag [#allocation3], 1
    %885 = vsyncpa %s884, 1

</llo_original>
